<compile_context>
chip_gen: v7x
topology: tpu7x:2x2x1
jax: 0.10.0
libtpu: 0.0.40
codegen_flags: <defaults>
</compile_context>

<pallas_src>
import functools

import jax
import jax.numpy as jnp
from jax.experimental import pallas as pl
from jax.experimental.pallas import tpu as pltpu


def _round_up(x, m):
    return ((x + m - 1) // m) * m


def _fused_heads_kernel(*refs, has_mask, inv_keep):
    """One grid step (head h, C-tile j, K-tile k) of dropout(x) @ W + b."""
    if has_mask:
        ktiles_ref, x_ref, m_ref, w_ref, b_ref, o_ref, acc_ref = refs
    else:
        ktiles_ref, x_ref, w_ref, b_ref, o_ref, acc_ref = refs
        m_ref = None

    h = pl.program_id(0)
    k = pl.program_id(2)

    @pl.when(k == 0)
    def _init():
        acc_ref[...] = jnp.zeros_like(acc_ref)

    # Heads shallower than Dpad own fewer K tiles: the index_maps clamp the
    # block index there (so the weight/x/mask DMA is skipped by the pipeline)
    # and this guard skips the matmul.
    @pl.when(k < ktiles_ref[h])
    def _accum():
        w = w_ref[0]                                  # (tk, tn), bf16
        x = x_ref[0]                                  # (B, tk),  f32
        if m_ref is not None:
            # bf16 {0,1} keep mask; exact 1/(1-p) scale applied in f32 (VPU,
            # essentially free in this DMA-bound kernel).
            x = x * (m_ref[0].astype(jnp.float32) * inv_keep)
        acc_ref[...] += jnp.dot(x.astype(w.dtype), w,
                                preferred_element_type=jnp.float32)

    @pl.when(k == pl.num_programs(2) - 1)
    def _finalize():
        o_ref[0] = (acc_ref[...] + b_ref[0]).astype(o_ref.dtype)   # bias in f32


def fused_drop_fc(ktiles, x_stk, w_stk, b_stk, mask_stk=None, *,
                  tk, tn, inv_keep=2.0):
    """All classifier heads as one gridded, pipelined pallas_call.

    ktiles   : list[int] (H,)   per-head number of real K tiles
    x_stk    : (H, B, Dpad)     zero-padded, stacked inputs (f32)
    w_stk    : (H, Dpad, Cpad)  zero-padded, stacked W.T (bf16)
    b_stk    : (H, 1, Cpad)     zero-padded, stacked biases (f32)
    mask_stk : optional (H, B, Dpad) bf16 {0,1} keep mask
    returns  : (H, B, Cpad)
    """
    H, B, Dpad = x_stk.shape
    _, _, Cpad = w_stk.shape
    assert Dpad % tk == 0 and Cpad % tn == 0
    n_k = Dpad // tk
    n_ct = Cpad // tn
    grid = (H, n_ct, n_k)

    # Per-head K clamp: for k >= ktiles[h] the block index repeats, so the
    # pipeline re-uses the resident buffer instead of DMA-ing padded zeros.
    def x_map(h, j, k, kt):
        return (h, 0, jnp.minimum(k, kt[h] - 1))

    def w_map(h, j, k, kt):
        return (h, jnp.minimum(k, kt[h] - 1), j)

    x_spec = pl.BlockSpec((1, B, tk), x_map)
    w_spec = pl.BlockSpec((1, tk, tn), w_map)
    b_spec = pl.BlockSpec((1, 1, tn), lambda h, j, k, kt: (h, 0, j))
    o_spec = pl.BlockSpec((1, B, tn), lambda h, j, k, kt: (h, 0, j))

    has_mask = mask_stk is not None
    in_specs = [x_spec] + ([x_spec] if has_mask else []) + [w_spec, b_spec]
    tensor_args = (x_stk,) + ((mask_stk,) if has_mask else ()) + (w_stk, b_stk)

    ktiles_host = [int(v) for v in ktiles]
    itm = lambda a: jnp.dtype(a.dtype).itemsize
    active_k = sum(ktiles_host) * tk          # weight rows actually streamed
    flops = 2 * B * Cpad * active_k
    bytes_accessed = int(
        active_k * Cpad * itm(w_stk)                         # weights
        + active_k * B * itm(x_stk) * n_ct                   # activations
        + (active_k * B * itm(mask_stk) * n_ct if has_mask else 0)
        + H * Cpad * itm(b_stk)                              # bias
        + H * B * Cpad * itm(x_stk))                         # output

    # VMEM footprint (double-buffered tiles + accumulator).  Only set an
    # explicit limit if we need more than the smallest (v5e) scoped default.
    vmem_est = (2 * tk * tn * itm(w_stk)
                + 2 * B * tk * itm(x_stk)
                + (2 * B * tk * itm(mask_stk) if has_mask else 0)
                + B * tn * 4
                + 2 * B * tn * itm(x_stk)
                + 2 * tn * itm(b_stk))
    cp_kwargs = dict(dimension_semantics=("parallel", "parallel", "arbitrary"))
    if vmem_est > (12 << 20):
        cp_kwargs["vmem_limit_bytes"] = int(min(2 * vmem_est, 64 << 20))

    return pl.pallas_call(
        functools.partial(_fused_heads_kernel, has_mask=has_mask,
                          inv_keep=float(inv_keep)),
        out_shape=jax.ShapeDtypeStruct((H, B, Cpad), x_stk.dtype),
        grid_spec=pltpu.PrefetchScalarGridSpec(
            num_scalar_prefetch=1,
            grid=grid,
            in_specs=in_specs,
            out_specs=o_spec,
            scratch_shapes=[pltpu.VMEM((B, tn), jnp.float32)]),
        compiler_params=pltpu.CompilerParams(**cp_kwargs),
        cost_estimate=pl.CostEstimate(flops=int(flops), transcendentals=0,
                                      bytes_accessed=bytes_accessed),
    )(jnp.asarray(ktiles_host, jnp.int32), *tensor_args)


class ClassifierDrop1FC:
    """JAX/Pallas port of Classifier_Drop_1FC (Dropout(0.5) + Linear per head)."""

    def __init__(self, in_dim, class_num, key, *, p_drop=0.5,
                 param_dtype=jnp.float32, weight_dtype=jnp.bfloat16,
                 tile_k=None, tile_n=None):
        self.class_num = class_num
        self.classifier_num = len(in_dim)
        self.in_dim = list(in_dim)
        self.p_drop = float(p_drop)
        H = self.classifier_num

        # ---- class (lane) dimension: pad to 128 only; one C tile if small ---
        self.Cpad = _round_up(class_num, 128)
        if tile_n is not None:
            tn = tile_n
        elif self.Cpad <= 1024:
            tn = self.Cpad
        else:
            tn = 128
            for cand in range(1024, 127, -128):
                if self.Cpad % cand == 0:
                    tn = cand
                    break
        # v7x megacore: keep the "parallel" grid extent H*(Cpad//tn) >= 2.
        if (tile_n is None and H * (self.Cpad // tn) < 2
                and tn >= 256 and (tn // 2) % 128 == 0):
            tn //= 2
        self.tn = tn

        # ---- contraction (K) tile: big enough to amortize the ~0.35us/step
        # overhead, capped so one bf16 weight tile stays <= 4 MiB, and bounded
        # below by the shallowest head so per-head tile skipping stays useful.
        w_itemsize = jnp.dtype(weight_dtype).itemsize
        d_lo = _round_up(min(in_dim), 128)
        d_hi = _round_up(max(in_dim), 128)
        budget_k = max(128, ((4 << 20) // (self.tn * w_itemsize)) // 128 * 128)
        if tile_k is not None:
            tk = tile_k
        else:
            tk = max(128, min(d_hi, budget_k, max(d_lo, 1024)))
        self.tk = tk
        self.Dpad = _round_up(max(in_dim), tk)
        self.ktiles = [max(1, -(-d // tk)) for d in in_dim]   # per-head K tiles

        # ---- parameters ------------------------------------------------------
        self.params = []                 # per-head (w (D,C), b (C,)) in f32 (reference)
        w_pad, b_pad = [], []
        for d in in_dim:
            key, k_w, k_b = jax.random.split(key, 3)
            # Match nn.Linear default init: U(-1/sqrt(in), 1/sqrt(in)).
            bound = 1.0 / (d ** 0.5)
            # Stored as (in_dim, class_num) == W.T relative to PyTorch.
            w = jax.random.uniform(k_w, (d, class_num), param_dtype,
                                   minval=-bound, maxval=bound)
            b = jax.random.uniform(k_b, (class_num,), param_dtype,
                                   minval=-bound, maxval=bound)
            self.params.append((w, b))
            w_pad.append(jnp.pad(w, ((0, self.Dpad - d),
                                     (0, self.Cpad - class_num))))
            b_pad.append(jnp.pad(b.reshape(1, class_num),
                                 ((0, 0), (0, self.Cpad - class_num))))
        # Weights stream in bf16 (kernel is weight-HBM-BW bound); bias stays f32.
        self.w_stk = jnp.stack(w_pad).astype(weight_dtype)   # (H, Dpad, Cpad)
        self.b_stk = jnp.stack(b_pad)                         # (H, 1, Cpad) f32

    def _stack_inputs(self, inputs):
        xs = [jnp.pad(x, ((0, 0), (0, self.Dpad - x.shape[1]))) for x in inputs]
        return jnp.stack(xs)             # (H, B, Dpad)

    def dropout_mask(self, rng, batch):
        """bf16 {0,1} keep mask; the 1/(1-p) scale is applied in-kernel in f32."""
        keep = jax.random.bernoulli(rng, 1.0 - self.p_drop,
                                    (self.classifier_num, batch, self.Dpad))
        return keep.astype(jnp.bfloat16)

    def __call__(self, inputs, *, training=False, rng=None):
        assert len(inputs) == self.classifier_num
        x_stk = self._stack_inputs(inputs)
        mask = None
        if training:
            assert rng is not None, "training=True requires an rng key"
            mask = self.dropout_mask(rng, x_stk.shape[1])
        inv_keep = 1.0 / (1.0 - self.p_drop) if self.p_drop < 1.0 else 0.0
        out = fused_drop_fc(self.ktiles, x_stk, self.w_stk, self.b_stk, mask,
                            tk=self.tk, tn=self.tn, inv_keep=inv_keep)
        outs = [out[s, :, :self.class_num] for s in range(self.classifier_num)]
        if len(outs) > 1:
            return tuple(outs)
        return outs[0]

    def get_class_num(self):
        return self.class_num


if __name__ == "__main__":
    key = jax.random.PRNGKey(0)

    def bf16_round(a):
        return a.astype(jnp.bfloat16).astype(jnp.float32)

    def check(model, inputs, *, training=False, rng=None, tag=""):
        outs = jax.block_until_ready(model(inputs, training=training, rng=rng))
        if model.classifier_num == 1:
            outs = (outs,)
        mask = model.dropout_mask(rng, inputs[0].shape[0]) if training else None
        inv = 1.0 / (1.0 - model.p_drop)
        for s in range(model.classifier_num):
            w, b = model.params[s]
            x = inputs[s]
            if mask is not None:
                x = x * (mask[s, :, :x.shape[1]].astype(jnp.float32) * inv)
            # Reference mimics the kernel's bf16 MXU feed with f32 accumulate.
            ref = bf16_round(x) @ bf16_round(w) + b
            assert outs[s].shape == (x.shape[0], model.class_num)
            err = float(jnp.max(jnp.abs(outs[s] - ref)))
            assert jnp.allclose(outs[s], ref, atol=2e-2, rtol=2e-2), \
                f"{tag} head {s} mismatch (max abs err {err})"

    # --- small homogeneous config (module defaults) --------------------------
    in_dim, class_num, batch = [32, 48], 10, 2
    k_model, k_x0, k_x1, k_drop, key = jax.random.split(key, 5)
    model = ClassifierDrop1FC(in_dim, class_num, k_model)
    inputs = [jax.random.normal(k_x0, (batch, in_dim[0]), jnp.float32),
              jax.random.normal(k_x1, (batch, in_dim[1]), jnp.float32)]
    check(model, inputs, training=False, tag="eval")
    check(model, inputs, training=True, rng=k_drop, tag="train")

    # --- heterogeneous heads: exercises the per-head K-tile clamp/skip path --
    in_dim2, batch2 = [128, 384], 2
    k_model2, k_y0, k_y1, key = jax.random.split(key, 4)
    model2 = ClassifierDrop1FC(in_dim2, class_num, k_model2, tile_k=128)
    inputs2 = [jax.random.normal(k_y0, (batch2, in_dim2[0]), jnp.float32),
               jax.random.normal(k_y1, (batch2, in_dim2[1]), jnp.float32)]
    check(model2, inputs2, training=False, tag="hetero eval")

    print("KERNEL_OK")
</pallas_src>

<mosaic_0001>
module attributes {stable_mosaic.version = 11 : i64} {
  func.func @_fused_heads_kernel(%arg0: i32, %arg1: i32, %arg2: i32, %arg3: memref<2xi32, #tpu.memory_space<smem>>, %arg4: memref<1x2x128xf32, #tpu.memory_space<vmem>>, %arg5: memref<1x128x128xbf16, #tpu.memory_space<vmem>>, %arg6: memref<1x1x128xf32, #tpu.memory_space<vmem>>, %arg7: memref<1x2x128xf32, #tpu.memory_space<vmem>>, %arg8: memref<2x128xf32, #tpu.memory_space<vmem>>) attributes {dimension_semantics = [#tpu.dimension_semantics<parallel>, #tpu.dimension_semantics<parallel>, #tpu.dimension_semantics<arbitrary>], iteration_bounds = array<i64: 2, 1, 1>, scalar_prefetch = 1 : i64, scratch_operands = 1 : i64, tpu.core_type = #tpu.core_type<tc>, window_params = [{transform_indices = @transform_0, window_bounds = array<i64: 1, 2, 128>}, {transform_indices = @transform_1, window_bounds = array<i64: 1, 128, 128>}, {transform_indices = @transform_2, window_bounds = array<i64: 1, 1, 128>}, {transform_indices = @transform_3, window_bounds = array<i64: 1, 2, 128>}]} {
    %c0_i32 = arith.constant 0 : i32
    %0 = arith.cmpi eq, %arg2, %c0_i32 : i32
    %1 = arith.extui %0 : i1 to i32
    %c0_i32_0 = arith.constant 0 : i32
    %2 = arith.cmpi ne, %1, %c0_i32_0 : i32
    scf.if %2 {
      %cst = arith.constant 0.000000e+00 : f32
      %11 = vector.broadcast %cst : f32 to vector<2x128xf32>
      %c0 = arith.constant 0 : index
      %c0_4 = arith.constant 0 : index
      %12 = vector.load %arg8[%c0, %c0_4] : memref<2x128xf32, #tpu.memory_space<vmem>>, vector<2x128xf32>
      tpu.vector_store %arg8[%c0, %c0_4], %11 {strides = array<i32>} : memref<2x128xf32, #tpu.memory_space<vmem>>, vector<2x128xf32>,
    } else {
    }
    %3 = arith.index_cast %arg0 : i32 to index
    %4 = memref.load %arg3[%3] : memref<2xi32, #tpu.memory_space<smem>>
    %5 = arith.cmpi slt, %arg2, %4 : i32
    %6 = arith.extui %5 : i1 to i32
    %c0_i32_1 = arith.constant 0 : i32
    %7 = arith.cmpi ne, %6, %c0_i32_1 : i32
    scf.if %7 {
      %c0 = arith.constant 0 : index
      %c0_4 = arith.constant 0 : index
      %c0_5 = arith.constant 0 : index
      %11 = vector.load %arg5[%c0, %c0_4, %c0_5] : memref<1x128x128xbf16, #tpu.memory_space<vmem>>, vector<1x128x128xbf16>
      %12 = vector.shape_cast %11 : vector<1x128x128xbf16> to vector<128x128xbf16>
      %c0_6 = arith.constant 0 : index
      %c0_7 = arith.constant 0 : index
      %c0_8 = arith.constant 0 : index
      %13 = vector.load %arg4[%c0_6, %c0_7, %c0_8] : memref<1x2x128xf32, #tpu.memory_space<vmem>>, vector<1x2x128xf32>
      %14 = vector.shape_cast %13 : vector<1x2x128xf32> to vector<2x128xf32>
      %c0_9 = arith.constant 0 : index
      %c0_10 = arith.constant 0 : index
      %15 = vector.load %arg8[%c0_9, %c0_10] : memref<2x128xf32, #tpu.memory_space<vmem>>, vector<2x128xf32>
      %16 = arith.truncf %14 : vector<2x128xf32> to vector<2x128xbf16>
      %cst = arith.constant dense<0.000000e+00> : vector<2x128xf32>
      %17 = tpu.matmul %16, %12, %cst {dimension_numbers = #tpu.dot_dimension_numbers<[1], [0], [0], [1], [0, 0, 1, 1], [], []>} : vector<2x128xbf16>, vector<128x128xbf16>, vector<2x128xf32> -> vector<2x128xf32>
      %18 = arith.addf %15, %17 : vector<2x128xf32>
      %c0_11 = arith.constant 0 : index
      %c0_12 = arith.constant 0 : index
      %19 = vector.load %arg8[%c0_11, %c0_12] : memref<2x128xf32, #tpu.memory_space<vmem>>, vector<2x128xf32>
      tpu.vector_store %arg8[%c0_11, %c0_12], %18 {strides = array<i32>} : memref<2x128xf32, #tpu.memory_space<vmem>>, vector<2x128xf32>,
    } else {
    }
    %c0_i32_2 = arith.constant 0 : i32
    %8 = arith.cmpi eq, %arg2, %c0_i32_2 : i32
    %9 = arith.extui %8 : i1 to i32
    %c0_i32_3 = arith.constant 0 : i32
    %10 = arith.cmpi ne, %9, %c0_i32_3 : i32
    scf.if %10 {
      %c0 = arith.constant 0 : index
      %c0_4 = arith.constant 0 : index
      %11 = vector.load %arg8[%c0, %c0_4] : memref<2x128xf32, #tpu.memory_space<vmem>>, vector<2x128xf32>
      %c0_5 = arith.constant 0 : index
      %c0_6 = arith.constant 0 : index
      %c0_7 = arith.constant 0 : index
      %12 = vector.load %arg6[%c0_5, %c0_6, %c0_7] : memref<1x1x128xf32, #tpu.memory_space<vmem>>, vector<1x1x128xf32>
      %13 = vector.shape_cast %12 : vector<1x1x128xf32> to vector<1x128xf32>
      %14 = vector.broadcast %13 : vector<1x128xf32> to vector<2x128xf32>
      %15 = arith.addf %11, %14 : vector<2x128xf32>
      %c0_8 = arith.constant 0 : index
      %c0_9 = arith.constant 0 : index
      %c0_10 = arith.constant 0 : index
      %16 = vector.load %arg7[%c0_8, %c0_9, %c0_10] : memref<1x2x128xf32, #tpu.memory_space<vmem>>, vector<1x2x128xf32>
      %17 = vector.shape_cast %16 : vector<1x2x128xf32> to vector<2x128xf32>
      %18 = vector.shape_cast %15 : vector<2x128xf32> to vector<1x2x128xf32>
      tpu.vector_store %arg7[%c0_8, %c0_9, %c0_10], %18 {strides = array<i32>} : memref<1x2x128xf32, #tpu.memory_space<vmem>>, vector<1x2x128xf32>,
    } else {
    }
    return
  }
  func.func @transform_0(%arg0: i32, %arg1: i32, %arg2: i32, %arg3: memref<2xi32, #tpu.memory_space<smem>>) -> (i32, i32, i32) {
    %0 = arith.index_cast %arg0 : i32 to index
    %1 = memref.load %arg3[%0] : memref<2xi32, #tpu.memory_space<smem>>
    %c1_i32 = arith.constant 1 : i32
    %2 = arith.subi %1, %c1_i32 : i32
    %3 = arith.minsi %arg2, %2 : i32
    %c0_i32 = arith.constant 0 : i32
    %c0_i32_0 = arith.constant 0 : i32
    return %arg0, %c0_i32, %3 : i32, i32, i32
  }
  func.func @transform_1(%arg0: i32, %arg1: i32, %arg2: i32, %arg3: memref<2xi32, #tpu.memory_space<smem>>) -> (i32, i32, i32) {
    %0 = arith.index_cast %arg0 : i32 to index
    %1 = memref.load %arg3[%0] : memref<2xi32, #tpu.memory_space<smem>>
    %c1_i32 = arith.constant 1 : i32
    %2 = arith.subi %1, %c1_i32 : i32
    %3 = arith.minsi %arg2, %2 : i32
    %c0_i32 = arith.constant 0 : i32
    return %arg0, %3, %arg1 : i32, i32, i32
  }
  func.func @transform_2(%arg0: i32, %arg1: i32, %arg2: i32, %arg3: memref<2xi32, #tpu.memory_space<smem>>) -> (i32, i32, i32) {
    %c0_i32 = arith.constant 0 : i32
    %c0_i32_0 = arith.constant 0 : i32
    return %arg0, %c0_i32, %arg1 : i32, i32, i32
  }
  func.func @transform_3(%arg0: i32, %arg1: i32, %arg2: i32, %arg3: memref<2xi32, #tpu.memory_space<smem>>) -> (i32, i32, i32) {
    %c0_i32 = arith.constant 0 : i32
    %c0_i32_0 = arith.constant 0 : i32
    return %arg0, %c0_i32, %arg1 : i32, i32, i32
  }
}

</mosaic_0001>

<llo_original>
// kernel: tpu_custom_call.1
$region0: #{tpu_custom_call.1}
  #allocation0 [shape = 'u32[]', space=smem, size = 0x4, offset = 0x4, fixed_abs, tag = 'smem constant byte address 0x4 - core index']
  #allocation1 [shape = 'u32[144,128]{1,0:T(1,128)}', space=vmem, size = 0x12000, scoped, tag = 'internal scratch']
  #allocation2 [shape = 'f32[2,128]{1,0:T(2,128)}', space=vmem, size = 0x400, scoped, tag = 'scratch operand']
  #allocation3 [shape = 's32[1]{0}', space=sflag, size = 0x4, scoped, tag = 'scoped memory for tpu_custom_call.1']
  #allocation4 [shape = 'u8[512]{0}', space=smem, size = 0x200, scoped, tag = 'prefetched SMEM operand 0']
  %s0 = inlined_call_operand.hbm [shape: s32[2], index: 0, kind: input, shape index: {}]
  %s1 = inlined_call_operand.hbm [shape: f32[2,2,128], index: 1, kind: input, shape index: {}]
  %s2 = inlined_call_operand.hbm [shape: bf16[2,128,128], index: 2, kind: input, shape index: {}]
  %s3 = inlined_call_operand.vmem [shape: f32[2,1,128], index: 3, kind: input, shape index: {}]
  %s4 = inlined_call_operand.hbm [shape: f32[2,2,128], index: 4, kind: output, shape index: {}]
  %s5 = sld [smem:[#allocation0]]
  $region65: #{tpu_custom_call.1} parent=0
    _
  %s7 = ssub.s32 1, %s5
  %s8 = scalar_select 0, %s7, %s5
  %10 = dma.hbm_to_smem %s0, 16, [#allocation4], [#allocation3]
  %11 = dma.done [#allocation3], 16
  %12 = sfence
  $region1: #{tpu_custom_call.1} parent=0
    #allocation5 [shape = 'u8[2048]{0}', space=vmem, size = 0x800, scoped, tag = 'input window, operand 1']
    #allocation6 [shape = 's32[2]{0}', space=sflag, size = 0x8, scoped, tag = 'scoped memory for tpu_custom_call.1']
    #allocation7 [shape = 's32[2]{0}', space=sflag, size = 0x8, scoped, tag = 'scoped memory for tpu_custom_call.1']
    #allocation8 [shape = 'u8[65536]{0}', space=vmem, size = 0x10000, scoped, tag = 'input window, operand 2']
    #allocation9 [shape = 's32[2]{0}', space=sflag, size = 0x8, scoped, tag = 'scoped memory for tpu_custom_call.1']
    #allocation10 [shape = 'u8[2048]{0}', space=vmem, size = 0x800, scoped, tag = 'output window, operand 0']
    %13 = vsyncpa [#allocation6], 0
    %s14 = scalar_lea.sflag [#allocation6], 1
    %15 = vsyncpa %s14, 0
    %16 = vsyncpa [#allocation9], 0
    %s17 = scalar_lea.sflag [#allocation9], 1
    %18 = vsyncpa %s17, 0
    %19 = vsyncpa [#allocation7], 0
    %s20 = scalar_lea.sflag [#allocation7], 1
    %21 = vsyncpa %s20, 0
    loop: start=0, step=1, limit=4
    $region2: #{tpu_custom_call.1} parent=1 // loop_pre_header
      _
    $region3: #{tpu_custom_call.1} parent=1 // loop_header
      %s23 = sphi 0, %s27
      %p24 = scmp.ge.s32.totalorder %s23, 4
      %s30 = sphi 0, %s49
      %s31 = sphi 0, %s45
      %s32 = sphi 0, %s41
      %s33 = sphi 0, %s30
      %s34 = sphi 0, %s31
      %s35 = sphi 0, %s32
      %s36 = sphi 0, %s33
      %s37 = sphi 0, %s34
      %s38 = sphi 0, %s35
      %s62 = sphi 0, %s64
      %s65 = sphi 0, %s62
      %s66 = sphi 0, %s65
      %s82 = sphi 0, %s66
      %s100 = sphi 0, %s102
      %s103 = sphi 0, %s100
      %s104 = sphi 0, %s103
      %s120 = sphi 0, %s104
      %s128 = sphi 0, %s130
      %s131 = sphi 0, %s128
      %s132 = sphi 0, %s131
      %s148 = sphi 0, %s132
      %s156 = sphi 0, %s158
      %s159 = sphi 0, %s156
      %s160 = sphi 0, %s159
      %s176 = sphi 0, %s160
    $region4: #{tpu_custom_call.1} parent=1 // loop_header_branch
      %26 = sbr.rel (%p24) target = $region8
    $region5: #{tpu_custom_call.1} parent=1 // loop_body
      %s28 = ssub.s32 %s23, 1
      %s29 = ssub.s32 %s23, 2
      %s39 = sadd.s32 1, %s32
      %p40 = scmp.ge.s32.totalorder %s39, 1
      %s41 = scalar_select %p40, 0, %s39
      %s42 = sadd.s32 1, %s31
      %s43 = scalar_select %p40, %s42, %s31
      %p44 = scmp.ge.s32.totalorder %s43, 1
      %s45 = scalar_select %p44, 0, %s43
      %s46 = sadd.s32 1, %s30
      %s47 = scalar_select %p44, %s46, %s30
      %p48 = scmp.ge.s32.totalorder %s47, 2
      %s49 = scalar_select %p48, 0, %s47
      %s50 = sld [smem:[#allocation4 + %s30]]
      %s51 = ssub.s32 %s50, 1
      %p52 = scmp.lt.s32.totalorder %s32, %s51
      %s53 = scalar_select %p52, %s32, %s51
      %s54 = sld [smem:[#allocation4 + %s49]]
      %s55 = ssub.s32 %s54, 1
      %p56 = scmp.lt.s32.totalorder %s41, %s55
      %s57 = scalar_select %p56, %s41, %s55
      %s58 = ssub.s32 %s30, %s49
      %s59 = ssub.s32 %s53, %s57
      %s60 = sor.u32 %s58, %s59
      %p61 = scmp.eq.s32.totalorder %s60, 0
      %s63 = sadd.s32 %s62, 1
      %s64 = scalar_select %p61, %s62, %s63
      %p67 = pneg %p61
      %p68 = scmp.eq.s32.totalorder %s23, 1
      %p69 = por %p67, %p68
      %p70 = scmp.ne.s32.totalorder %s62, %s65
      %p71 = scmp.eq.s32.totalorder %s23, 0
      %p72 = por %p70, %p71
      %p73 = scmp.ne.s32.totalorder %s62, %s65
      %p74 = scmp.eq.s32.totalorder %s28, 1
      %p75 = por %p73, %p74
      %p76 = scmp.ne.s32.totalorder %s65, %s66
      %p77 = scmp.eq.s32.totalorder %s28, 0
      %p78 = por %p76, %p77
      %p79 = scmp.ne.s32.totalorder %s65, %s66
      %p80 = scmp.eq.s32.totalorder %s29, 1
      %p81 = por %p79, %p80
      %p83 = scmp.ne.s32.totalorder %s66, %s82
      %p84 = scmp.eq.s32.totalorder %s29, 0
      %p85 = por %p83, %p84
      %s86 = sld [smem:[#allocation4 + %s30]]
      %s87 = ssub.s32 %s86, 1
      %p88 = scmp.lt.s32.totalorder %s32, %s87
      %s89 = scalar_select %p88, %s32, %s87
      %s90 = sld [smem:[#allocation4 + %s49]]
      %s91 = ssub.s32 %s90, 1
      %p92 = scmp.lt.s32.totalorder %s41, %s91
      %s93 = scalar_select %p92, %s41, %s91
      %s94 = ssub.s32 %s30, %s49
      %s95 = ssub.s32 %s89, %s93
      %s96 = sor.u32 %s94, %s95
      %s97 = ssub.s32 %s31, %s45
      %s98 = sor.u32 %s96, %s97
      %p99 = scmp.eq.s32.totalorder %s98, 0
      %s101 = sadd.s32 %s100, 1
      %s102 = scalar_select %p99, %s100, %s101
      %p105 = pneg %p99
      %p106 = scmp.eq.s32.totalorder %s23, 1
      %p107 = por %p105, %p106
      %p108 = scmp.ne.s32.totalorder %s100, %s103
      %p109 = scmp.eq.s32.totalorder %s23, 0
      %p110 = por %p108, %p109
      %p111 = scmp.ne.s32.totalorder %s100, %s103
      %p112 = scmp.eq.s32.totalorder %s28, 1
      %p113 = por %p111, %p112
      %p114 = scmp.ne.s32.totalorder %s103, %s104
      %p115 = scmp.eq.s32.totalorder %s28, 0
      %p116 = por %p114, %p115
      %p117 = scmp.ne.s32.totalorder %s103, %s104
      %p118 = scmp.eq.s32.totalorder %s29, 1
      %p119 = por %p117, %p118
      %p121 = scmp.ne.s32.totalorder %s104, %s120
      %p122 = scmp.eq.s32.totalorder %s29, 0
      %p123 = por %p121, %p122
      %s124 = ssub.s32 %s30, %s49
      %s125 = ssub.s32 %s31, %s45
      %s126 = sor.u32 %s124, %s125
      %p127 = scmp.eq.s32.totalorder %s126, 0
      %s129 = sadd.s32 %s128, 1
      %s130 = scalar_select %p127, %s128, %s129
      %p133 = pneg %p127
      %p134 = scmp.eq.s32.totalorder %s23, 1
      %p135 = por %p133, %p134
      %p136 = scmp.ne.s32.totalorder %s128, %s131
      %p137 = scmp.eq.s32.totalorder %s23, 0
      %p138 = por %p136, %p137
      %p139 = scmp.ne.s32.totalorder %s128, %s131
      %p140 = scmp.eq.s32.totalorder %s28, 1
      %p141 = por %p139, %p140
      %p142 = scmp.ne.s32.totalorder %s131, %s132
      %p143 = scmp.eq.s32.totalorder %s28, 0
      %p144 = por %p142, %p143
      %p145 = scmp.ne.s32.totalorder %s131, %s132
      %p146 = scmp.eq.s32.totalorder %s29, 1
      %p147 = por %p145, %p146
      %p149 = scmp.ne.s32.totalorder %s132, %s148
      %p150 = scmp.eq.s32.totalorder %s29, 0
      %p151 = por %p149, %p150
      %s152 = ssub.s32 %s30, %s49
      %s153 = ssub.s32 %s31, %s45
      %s154 = sor.u32 %s152, %s153
      %p155 = scmp.eq.s32.totalorder %s154, 0
      %s157 = sadd.s32 %s156, 1
      %s158 = scalar_select %p155, %s156, %s157
      %p161 = pneg %p155
      %p162 = scmp.eq.s32.totalorder %s23, 1
      %p163 = por %p161, %p162
      %p164 = scmp.ne.s32.totalorder %s156, %s159
      %p165 = scmp.eq.s32.totalorder %s23, 0
      %p166 = por %p164, %p165
      %p167 = scmp.ne.s32.totalorder %s156, %s159
      %p168 = scmp.eq.s32.totalorder %s28, 1
      %p169 = por %p167, %p168
      %p170 = scmp.ne.s32.totalorder %s159, %s160
      %p171 = scmp.eq.s32.totalorder %s28, 0
      %p172 = por %p170, %p171
      %p173 = scmp.ne.s32.totalorder %s159, %s160
      %p174 = scmp.eq.s32.totalorder %s29, 1
      %p175 = por %p173, %p174
      %p177 = scmp.ne.s32.totalorder %s160, %s176
      %p178 = scmp.eq.s32.totalorder %s29, 0
      %p179 = por %p177, %p178
      %p180 = scmp.le.s32.totalorder 1, %s23
      %p181 = scmp.lt.s32.totalorder %s23, 3
      %p182 = pnand %p180, %p181
      %p183 = pneg %p182
      // Predicated region
      $region9: #{tpu_custom_call.1} parent=5 // pred_check
        _
      $region10: #{tpu_custom_call.1} parent=5 // pred_check_branch
        %185 = sbr.rel (%p182) target = $region12
      $region11: #{tpu_custom_call.1} parent=5 // pred_region
        %s186 = ssub.s32 %s23, 1
      $region12: #{tpu_custom_call.1} parent=5 // pred_fallthru
        _
      %p187 = scmp.lt.s32.totalorder %s23, 2
      // Predicated region
      $region13: #{tpu_custom_call.1} parent=5 // pred_check
        %p188 = pneg %p187
      $region14: #{tpu_custom_call.1} parent=5 // pred_check_branch
        %190 = sbr.rel (%p188) target = $region16
      $region15: #{tpu_custom_call.1} parent=5 // pred_region
        // Predicated region
        $region17: #{tpu_custom_call.1} parent=15 // pred_check
          %p191 = pneg %p72
        $region18: #{tpu_custom_call.1} parent=15 // pred_check_branch
          %193 = sbr.rel (%p191) target = $region20
        $region19: #{tpu_custom_call.1} parent=15 // pred_region
          %s194 = sand.u32 %s62, 1
          %s195 = scalar_lea.sflag [#allocation6], %s194
          %s196 = sand.u32 %s62, 1
          %s197 = smul.addr %s196, 2
          %s198 = scalar_lea.vmem [#allocation5], %s197
          %s199 = sld [smem:[#allocation4 + %s30]]
          %s200 = ssub.s32 %s199, 1
          %p201 = scmp.lt.s32.totalorder %s32, %s200
          %s202 = scalar_select %p201, %s32, %s200
          %s204 = ssub.s32 32, 32
          %205 = vsyncadd %s195, %s204
          %s206 = sadd.s32 %s202, %s30
          %s207 = smul.addr %s206, 32
          %s208 = scalar_lea.hbm %s1, %s207
          %s210 = sshll.u32 %s198, 4
          %s211 = int_to_ptr.vmem [resolvable:$true] %s210
          %213 = dma.hbm_to_vmem [thread:$0]  %s208, 32, %s211, %s195
        $region20: #{tpu_custom_call.1} parent=15 // pred_fallthru
          _
        // Predicated region
        $region21: #{tpu_custom_call.1} parent=15 // pred_check
          %p214 = pneg %p110
        $region22: #{tpu_custom_call.1} parent=15 // pred_check_branch
          %216 = sbr.rel (%p214) target = $region24
        $region23: #{tpu_custom_call.1} parent=15 // pred_region
          %s217 = sand.u32 %s100, 1
          %s218 = scalar_lea.sflag [#allocation9], %s217
          %s219 = sand.u32 %s100, 1
          %s220 = smul.addr %s219, 64
          %s221 = scalar_lea.vmem [#allocation8], %s220
          %s222 = sld [smem:[#allocation4 + %s30]]
          %s223 = ssub.s32 %s222, 1
          %p224 = scmp.lt.s32.totalorder %s32, %s223
          %s225 = scalar_select %p224, %s32, %s223
          %s226 = smul.u32 16, %s225
          %s228 = ssub.s32 1024, 1024
          %229 = vsyncadd %s218, %s228
          %s230 = sadd.s32 %s31, %s226
          %s231 = smul.addr %s30, 16
          %s232 = sadd.s32 %s230, %s231
          %s233 = smul.addr %s232, 64
          %s234 = scalar_lea.hbm %s2, %s233
          %s235 = sshll.u32 %s221, 4
          %s236 = int_to_ptr.vmem [resolvable:$true] %s235
          %241 = dma.hbm_to_vmem [thread:$0]  %s234, 1024, %s236, %s218, 64, 64, 4
        $region24: #{tpu_custom_call.1} parent=15 // pred_fallthru
          _
        // Predicated region
        $region25: #{tpu_custom_call.1} parent=15 // pred_check
          %p242 = pneg %p138
        $region26: #{tpu_custom_call.1} parent=15 // pred_check_branch
          %244 = sbr.rel (%p242) target = $region28
        $region27: #{tpu_custom_call.1} parent=15 // pred_region
          %p245 = scmp.lt.s32.totalorder %s30, 1
          %s246 = scalar_select %p245, %s30, 1
          %p247 = scmp.lt.s32.totalorder %s31, 0
          %s248 = scalar_select %p247, %s31, 0
          %s249 = sadd.s32 %s248, %s246
          %s250 = scalar_lea.vmem %s3, %s249
        $region28: #{tpu_custom_call.1} parent=15 // pred_fallthru
          _
      $region16: #{tpu_custom_call.1} parent=5 // pred_fallthru
        _
      %p251 = scmp.le.s32.totalorder 1, %s23
      %p252 = scmp.lt.s32.totalorder %s23, 3
      %p253 = pnand %p251, %p252
      %p254 = pneg %p253
      // Predicated region
      $region29: #{tpu_custom_call.1} parent=5 // pred_check
        _
      $region30: #{tpu_custom_call.1} parent=5 // pred_check_branch
        %256 = sbr.rel (%p253) target = $region32
      $region31: #{tpu_custom_call.1} parent=5 // pred_region
        %s257 = ssub.s32 %s23, 1
        %s258 = sand.u32 %s65, 1
        %s259 = scalar_lea.sflag [#allocation6], %s258
        %s260 = sand.u32 %s65, 1
        %s261 = smul.addr %s260, 2
        %s262 = scalar_lea.vmem [#allocation5], %s261
        // Predicated region
        $region33: #{tpu_custom_call.1} parent=31 // pred_check
          %p263 = pneg %p78
        $region34: #{tpu_custom_call.1} parent=31 // pred_check_branch
          %265 = sbr.rel (%p263) target = $region36
        $region35: #{tpu_custom_call.1} parent=31 // pred_region
          %266 = dma.done %s259, 32
        $region36: #{tpu_custom_call.1} parent=31 // pred_fallthru
          _
        %s267 = sand.u32 %s103, 1
        %s268 = scalar_lea.sflag [#allocation9], %s267
        %s269 = sand.u32 %s103, 1
        %s270 = smul.addr %s269, 64
        %s271 = scalar_lea.vmem [#allocation8], %s270
        // Predicated region
        $region37: #{tpu_custom_call.1} parent=31 // pred_check
          %p272 = pneg %p116
        $region38: #{tpu_custom_call.1} parent=31 // pred_check_branch
          %274 = sbr.rel (%p272) target = $region40
        $region39: #{tpu_custom_call.1} parent=31 // pred_region
          %275 = dma.done %s268, 1024
        $region40: #{tpu_custom_call.1} parent=31 // pred_fallthru
          _
        %s276 = sand.u32 %s65, 1
        %s277 = scalar_lea.sflag [#allocation6], %s276
        %s278 = sand.u32 %s65, 1
        %s279 = smul.addr %s278, 2
        %s280 = scalar_lea.vmem [#allocation5], %s279
        %p281 = pneg %p78
        %p282 = pneg %p75
        %s283 = sand.u32 %s103, 1
        %s284 = scalar_lea.sflag [#allocation9], %s283
        %s285 = sand.u32 %s103, 1
        %s286 = smul.addr %s285, 64
        %s287 = scalar_lea.vmem [#allocation8], %s286
        %p288 = pneg %p116
        %p289 = pneg %p113
        %p290 = scmp.lt.s32.totalorder %s33, 1
        %s291 = scalar_select %p290, %s33, 1
        %p292 = scmp.lt.s32.totalorder %s34, 0
        %s293 = scalar_select %p292, %s34, 0
        %s294 = sadd.s32 %s293, %s291
        %s295 = scalar_lea.vmem %s3, %s294
        %p296 = pneg %p144
        %p297 = pneg %p141
        %p298 = pneg %p172
        %p299 = pneg %p169
        %s300 = sand.u32 %s159, 1
        %s301 = scalar_lea.sflag [#allocation7], %s300
        %s302 = sand.u32 %s159, 1
        %s303 = smul.addr %s302, 2
        %s304 = scalar_lea.vmem [#allocation10], %s303
        %s305 = sld [smem:[#allocation4 + %s33]]
        %s306 = ssub.s32 %s305, 1
        %p307 = scmp.lt.s32.totalorder %s35, %s306
        %s308 = scalar_select %p307, %s35, %s306
        %s309 = sld [smem:[#allocation4 + %s33]]
        %s310 = ssub.s32 %s309, 1
        %p311 = scmp.lt.s32.totalorder %s35, %s310
        %s312 = scalar_select %p311, %s35, %s310
        %s313 = smul.u32 16, %s312
        %p314 = scmp.lt.s32.totalorder %s33, 1
        %s315 = scalar_select %p314, %s33, 1
        %p316 = scmp.lt.s32.totalorder %s34, 0
        %s317 = scalar_select %p316, %s34, 0
        %s318 = sadd.s32 %s317, %s315
        %s319 = scalar_lea.vmem %s3, %s318
        %p321 = scmp.eq.s32.totalorder %s35, 0
        // Predicated region
        $region41: #{tpu_custom_call.1} parent=31 // pred_check
          %p322 = pneg %p321
        $region42: #{tpu_custom_call.1} parent=31 // pred_check_branch
          %324 = sbr.rel (%p322) target = $region44
        $region43: #{tpu_custom_call.1} parent=31 // pred_region
          %325 = vst [vmem:[#allocation2] sm:$0x3] 0.0
        $region44: #{tpu_custom_call.1} parent=31 // pred_fallthru
          _
        %s326 = sld [smem:[#allocation4 + %s33]]
        %p327 = scmp.lt.s32.totalorder %s35, %s326
        // Predicated region
        $region45: #{tpu_custom_call.1} parent=31 // pred_check
          %p328 = pneg %p327
        $region46: #{tpu_custom_call.1} parent=31 // pred_check_branch
          %330 = sbr.rel (%p328) target = $region48
        $region47: #{tpu_custom_call.1} parent=31 // pred_region
          %v331 = vld [vmem:[%s271] sm:$0xf]
          %v332 = vld [vmem:[%s271 + $0x4] sm:$0xf]
          %v333 = vld [vmem:[%s271 + $0x8] sm:$0xf]
          %v334 = vld [vmem:[%s271 + $0xc] sm:$0xf]
          %v335 = vld [vmem:[%s271 + $0x10] sm:$0xf]
          %v336 = vld [vmem:[%s271 + $0x14] sm:$0xf]
          %v337 = vld [vmem:[%s271 + $0x18] sm:$0xf]
          %v338 = vld [vmem:[%s271 + $0x1c] sm:$0xf]
          %v339 = vld [vmem:[%s271 + $0x20] sm:$0xf]
          %v340 = vld [vmem:[%s271 + $0x24] sm:$0xf]
          %v341 = vld [vmem:[%s271 + $0x28] sm:$0xf]
          %v342 = vld [vmem:[%s271 + $0x2c] sm:$0xf]
          %v343 = vld [vmem:[%s271 + $0x30] sm:$0xf]
          %v344 = vld [vmem:[%s271 + $0x34] sm:$0xf]
          %v345 = vld [vmem:[%s271 + $0x38] sm:$0xf]
          %v346 = vld [vmem:[%s271 + $0x3c] sm:$0xf]
          %v347 = vld [vmem:[%s262] sm:$0x3]
          %v348 = vld [vmem:[#allocation2] sm:$0x3]
          %v349 = vpack.c.bf16 %v347, %v347
          %v366 = vunpack.c.l.b16 %v331
          %v367 = vunpack.c.l.b16 %v332
          %v368 = vunpack.c.l.b16 %v333
          %v369 = vunpack.c.l.b16 %v334
          %v370 = vunpack.c.l.b16 %v335
          %v371 = vunpack.c.l.b16 %v336
          %v372 = vunpack.c.l.b16 %v337
          %v373 = vunpack.c.l.b16 %v338
          %v374 = vunpack.c.l.b16 %v339
          %v375 = vunpack.c.l.b16 %v340
          %v376 = vunpack.c.l.b16 %v341
          %v377 = vunpack.c.l.b16 %v342
          %v378 = vunpack.c.l.b16 %v343
          %v379 = vunpack.c.l.b16 %v344
          %v380 = vunpack.c.l.b16 %v345
          %v381 = vunpack.c.l.b16 %v346
          %v382 = vpack.c.b16 %v367, %v366
          %v383 = vpack.c.b16 %v369, %v368
          %v384 = vpack.c.b16 %v371, %v370
          %v385 = vpack.c.b16 %v373, %v372
          %v386 = vpack.c.b16 %v375, %v374
          %v387 = vpack.c.b16 %v377, %v376
          %v388 = vpack.c.b16 %v379, %v378
          %v389 = vpack.c.b16 %v381, %v380
          %398 = vmatprep.subr.bf16.mxu0 0
          %399 = vmatpush1.bf16.msra.mxu0 %v382
          %400 = vmatprep.subr.bf16.mxu0 0
          %401 = vmatpush1.bf16.msra.mxu0 %v383
          %402 = vmatprep.subr.bf16.mxu0 0
          %403 = vmatpush1.bf16.msra.mxu0 %v384
          %404 = vmatprep.subr.bf16.mxu0 0
          %405 = vmatpush1.bf16.msra.mxu0 %v385
          %406 = vmatprep.subr.bf16.mxu0 0
          %407 = vmatpush1.bf16.msra.mxu0 %v386
          %408 = vmatprep.subr.bf16.mxu0 0
          %409 = vmatpush1.bf16.msra.mxu0 %v387
          %410 = vmatprep.subr.bf16.mxu0 0
          %411 = vmatpush1.bf16.msra.mxu0 %v388
          %412 = vmatprep.subr.bf16.mxu0 0
          %413 = vmatpush1.bf16.msra.mxu0 %v389
          %414 = vmatprep.subr.bf16.mxu0 0
          %415 = vmatpush1.bf16.msra.mxu0 0
          %416 = vmatprep.subr.bf16.mxu0 0
          %417 = vmatpush1.bf16.msra.mxu0 0
          %418 = vmatprep.subr.bf16.mxu0 0
          %419 = vmatpush1.bf16.msra.mxu0 0
          %420 = vmatprep.subr.bf16.mxu0 0
          %421 = vmatpush1.bf16.msra.mxu0 0
          %422 = vmatprep.subr.bf16.mxu0 0
          %423 = vmatpush1.bf16.msra.mxu0 0
          %424 = vmatprep.subr.bf16.mxu0 0
          %425 = vmatpush1.bf16.msra.mxu0 0
          %426 = vmatprep.subr.bf16.mxu0 0
          %427 = vmatpush1.bf16.msra.mxu0 0
          %428 = vmatprep.subr.bf16.mxu0 0
          %429 = vmatpush1.bf16.msra.mxu0 0
          %430 = vmatprep.mubr.bf16.mxu0 0
          %431 = vmatmul.mubr.bf16.gmra.mrb[0].mxu0 %v349
          %v432 = vpop.f32.mrb[0].mxu0
          %v433 = vadd.f32 0.0, %v432
          %v434 = vpop.f32.mrb[0].mxu0
          %v435 = vpop.f32.mrb[0].mxu0
          %v436 = vpop.f32.mrb[0].mxu0
          %437 = vdwg.mxu0
          %v438 = vadd.f32 %v348, %v433
          %439 = vst [vmem:[#allocation2] sm:$0x3] %v438
        $region48: #{tpu_custom_call.1} parent=31 // pred_fallthru
          _
        // Predicated region
        $region49: #{tpu_custom_call.1} parent=31 // pred_check
          %p440 = pneg %p321
        $region50: #{tpu_custom_call.1} parent=31 // pred_check_branch
          %442 = sbr.rel (%p440) target = $region52
        $region51: #{tpu_custom_call.1} parent=31 // pred_region
          %v443 = vld [vmem:[#allocation2] sm:$0x3]
          %v444 = vld [vmem:[%s319] sm:$0x1]
          %v446 = vlaneseq
          %v447 = vshrl.u32 %v446, 7
          %v448 = vsub.s32 0, %v447
          %v449 = vrot.slane %v444, %v448
          %v451 = vadd.f32 %v443, %v449
          %452 = vst [vmem:[%s304] sm:$0x3] %v451
        $region52: #{tpu_custom_call.1} parent=31 // pred_fallthru
          _
        %s453 = sand.u32 %s159, 1
        %s454 = scalar_lea.sflag [#allocation7], %s453
        %s455 = sand.u32 %s159, 1
        %s456 = smul.addr %s455, 2
        %s457 = scalar_lea.vmem [#allocation10], %s456
        // Predicated region
        $region53: #{tpu_custom_call.1} parent=31 // pred_check
          %p458 = pneg %p169
        $region54: #{tpu_custom_call.1} parent=31 // pred_check_branch
          %460 = sbr.rel (%p458) target = $region56
        $region55: #{tpu_custom_call.1} parent=31 // pred_region
          %s462 = ssub.s32 32, 32
          %463 = vsyncadd %s454, %s462
          %s464 = sadd.s32 %s34, %s33
          %s465 = smul.addr %s464, 32
          %s466 = scalar_lea.hbm %s4, %s465
          %s468 = sshll.u32 %s457, 4
          %s469 = int_to_ptr.vmem [resolvable:$true] %s468
          %471 = dma.vmem_to_hbm [thread:$0]  %s469, 32, %s466, %s454
        $region56: #{tpu_custom_call.1} parent=31 // pred_fallthru
          _
      $region32: #{tpu_custom_call.1} parent=5 // pred_fallthru
        _
      %p472 = scmp.le.s32.totalorder 2, %s23
      // Predicated region
      $region57: #{tpu_custom_call.1} parent=5 // pred_check
        %p473 = pneg %p472
      $region58: #{tpu_custom_call.1} parent=5 // pred_check_branch
        %475 = sbr.rel (%p473) target = $region60
      $region59: #{tpu_custom_call.1} parent=5 // pred_region
        %s476 = ssub.s32 %s23, 2
        // Predicated region
        $region61: #{tpu_custom_call.1} parent=59 // pred_check
          %p477 = pneg %p175
        $region62: #{tpu_custom_call.1} parent=59 // pred_check_branch
          %479 = sbr.rel (%p477) target = $region64
        $region63: #{tpu_custom_call.1} parent=59 // pred_region
          %s480 = sand.u32 %s160, 1
          %s481 = scalar_lea.sflag [#allocation7], %s480
          %s482 = sand.u32 %s160, 1
          %s483 = smul.addr %s482, 2
          %s484 = scalar_lea.vmem [#allocation10], %s483
          %485 = dma.done %s481, 32
        $region64: #{tpu_custom_call.1} parent=59 // pred_fallthru
          _
      $region60: #{tpu_custom_call.1} parent=5 // pred_fallthru
        _
    $region6: #{tpu_custom_call.1} parent=1 // loop_footer
      %s27 = sadd.s32 1, %s23
    $region7: #{tpu_custom_call.1} parent=1 // loop_footer_branch
      %22 = sbr.rel target = $region3
    $region8: #{tpu_custom_call.1} parent=1 // loop_exit
      _
    %486 = vsyncpa [#allocation6], 1
    %s487 = scalar_lea.sflag [#allocation6], 1
    %488 = vsyncpa %s487, 1
    %489 = vsyncpa [#allocation9], 1
    %s490 = scalar_lea.sflag [#allocation9], 1
    %491 = vsyncpa %s490, 1
    %492 = vsyncpa [#allocation7], 1
    %s493 = scalar_lea.sflag [#allocation7], 1
    %494 = vsyncpa %s493, 1

</llo_original>
